<compile_context>
chip_gen: v5e
topology: v5e:2x2
jax: 0.10.0
libtpu: 0.0.40
codegen_flags: <defaults>
</compile_context>

<pallas_src>
import functools
import math

import jax
import jax.numpy as jnp
from jax import lax
from jax.experimental import pallas as pl
from jax.experimental.pallas import tpu as pltpu


# ----------------------------- parameter-side glue -----------------------------

def safe_inv(x):
    # matches torch: x**-1 with zeros mapped back to zero
    return jnp.where(x == 0, 0.0, 1.0 / jnp.where(x == 0, 1.0, x))


def compute_t(kernel, q):
    """kernel: (inner, cin, k, k), q: (inner,) -> t: (inner,) (parameter setup)."""
    k = kernel.shape[-1]
    ktk = lax.conv_general_dilated(
        kernel, kernel, window_strides=(1, 1),
        padding=[(k - 1, k - 1), (k - 1, k - 1)],
        dimension_numbers=("NCHW", "OIHW", "NCHW"),
        precision=lax.Precision.HIGHEST,
    )
    ktk = jnp.abs(ktk)
    qe = jnp.exp(q).reshape(-1, 1, 1, 1)
    qi = jnp.exp(-q).reshape(-1, 1, 1, 1)
    t = (qi * ktk * qe).sum(axis=(1, 2, 3))
    return safe_inv(t)   # t >= 0 by construction (sum of |.|*exp terms)


# --------------------------------- Pallas kernel --------------------------------

def _sll_kernel(x_ref, k1_ref, k2_ref, b_ref, m_ref, o_ref, col1_ref, col2_ref,
                *, W, L, ksz, cin, inner):
    # x_ref   : (cin, L)                activations, L = images_per_step * H * W
    # k1_ref  : (inner, ksz*ksz*cin)    k1[o,(dy*k+dx)*cin+c]   = t[o]*W[o,c,dy,dx]
    # k2_ref  : (cin, ksz*ksz*inner)    k2[c,(dy*k+dx)*inner+o] = -2*W[o,c,k-1-dy,k-1-dx]
    # b_ref   : (inner, 1)              t-folded bias
    # m_ref   : (4*half, L)             {0,1} f32 halo base masks (see wrapper)
    # o_ref   : (cin, L)                output block
    # col1_ref: (ksz*ksz*cin, L)  VMEM  im2col stack for conv1
    # col2_ref: (ksz*ksz*inner, L) VMEM im2col stack for conv2
    half = ksz // 2

    def base_mask(kind, s):
        # kind: 0 -> row < H - s, 1 -> row >= s, 2 -> col < W - s, 3 -> col >= s
        i = 4 * (s - 1) + kind
        return m_ref[i:i + 1, :]                                  # (1, L)

    def masked_shift(src, sy, sx):
        # src value at spatial offset (+sy, +sx); zero outside the image.
        s = sy * W + sx
        v = src if s == 0 else pltpu.roll(src, (-s) % L, axis=1)  # XLU lane rotate
        m = None
        if sy > 0:
            m = base_mask(0, sy)
        elif sy < 0:
            m = base_mask(1, -sy)
        if sx > 0:
            mc = base_mask(2, sx)
            m = mc if m is None else m * mc                       # (1, L) combine
        elif sx < 0:
            mc = base_mask(3, -sx)
            m = mc if m is None else m * mc
        return v if m is None else v * m

    x = x_ref[...]                                                # (cin, L) f32

    # ---- conv2d(x, K, padding=half): im2col stack, one MXU matmul (K=9*cin) ----
    for dy in range(ksz):
        for dx in range(ksz):
            tap = dy * ksz + dx
            col1_ref[tap * cin:(tap + 1) * cin, :] = masked_shift(x, dy - half, dx - half)
    acc1 = jnp.dot(k1_ref[...], col1_ref[...],
                   preferred_element_type=jnp.float32)            # (inner, L)
    res = jnp.maximum(acc1 + b_ref[...], 0.0)     # == t * relu(conv + bias), t >= 0

    # ---- conv_transpose2d(res, K, padding=half): one MXU matmul (K=9*inner) ----
    for dy in range(ksz):
        for dx in range(ksz):
            tap = dy * ksz + dx
            col2_ref[tap * inner:(tap + 1) * inner, :] = masked_shift(res, dy - half, dx - half)
    acc2 = jnp.dot(k2_ref[...], col2_ref[...],
                   preferred_element_type=jnp.float32)            # (cin, L)

    o_ref[...] = (x + acc2).astype(o_ref.dtype)   # x - 2 * conv_transpose(...)


# --------------------------- grid / block-size selection --------------------------

def _pick_grid(N, hw, cin, inner, ksz):
    """Choose (#grid steps G, per-step lane extent L, VMEM estimate in bytes)."""
    taps = ksz * ksz
    half = ksz // 2

    def vmem_bytes(L):
        dbuf_blocks = 2 * (cin * L) * 2            # x in + out blocks, double-buffered
        masks = 2 * (4 * half) * L
        col = (taps * cin + taps * inner) * L      # im2col scratches
        live = (2 * cin + 2 * inner + 4) * L       # x, res, acc1, acc2, temps
        return 4 * (dbuf_blocks + masks + col + live)

    budget = 24 * 1024 * 1024                      # conservative for v5e/v6e/v7x
    candidates = []
    for G in range(1, N + 1):
        if N % G:
            continue
        L = (N // G) * hw
        if G > 1 and L % 128 != 0:
            continue                               # last block dim must be 128-aligned
        candidates.append((G, L))

    fitting = [(G, L) for (G, L) in candidates if vmem_bytes(L) <= budget]
    if fitting:
        # Prefer a few large, lane-dense steps (DMA/compute pipelining) with an
        # even step count (v7x megacore); G == 1 only if nothing else fits.
        def rank(c):
            G, _ = c
            if G == 4:
                return (0, G)
            if G == 2:
                return (1, G)
            if G >= 2 and G % 2 == 0:
                return (2, G)
            if G >= 2:
                return (3, G)
            return (4, G)
        G, L = min(fitting, key=rank)
    else:
        # Nothing fits comfortably: smallest layout-valid block; wrapper raises
        # vmem_limit_bytes.
        G, L = max(candidates, key=lambda c: c[0])
    return G, L, vmem_bytes(L)


# ----------------------------------- wrapper ------------------------------------

def sll_forward(x_nchw, kernel, bias, q):
    """Forward pass of SLLxAOCLipschitzResBlock. x_nchw: (N, cin, H, W)."""
    N, cin, H, W = x_nchw.shape
    inner, cin_k, kh, kw = kernel.shape
    assert cin_k == cin and kh == kw and kh % 2 == 1
    ksz = kh
    half = ksz // 2
    assert half < H and half < W, "roll+mask halo scheme requires kernel radius < H, W"
    hw = H * W
    taps = ksz * ksz

    # --- parameter setup / constant folding (plain JAX, tiny tensors) ---
    t = compute_t(kernel, q)                                           # (inner,)
    k1f = (t[:, None, None, None] * kernel).astype(jnp.float32)        # (inner,cin,k,k)
    k1f = jnp.transpose(k1f, (0, 2, 3, 1)).reshape(inner, taps * cin)  # (inner, 9*cin)
    k2f = -2.0 * jnp.flip(kernel, axis=(2, 3))                         # (inner,cin,k,k)
    k2f = jnp.transpose(k2f, (1, 2, 3, 0)).reshape(cin, taps * inner)  # (cin, 9*inner)
    k2f = k2f.astype(jnp.float32)
    bf = (t * bias).reshape(inner, 1).astype(jnp.float32)

    # --- grid / block-size selection (layout- and VMEM-aware) ---
    G, L, vmem_est = _pick_grid(N, hw, cin, inner, ksz)
    nb = N // G                                    # images per grid step

    # --- halo base masks, precomputed once (no div/mod inside the kernel) ---
    pos = jnp.arange(hw, dtype=jnp.int32)
    row = pos // W
    col = pos % W
    base = []
    for s in range(1, half + 1):
        base += [row < H - s, row >= s, col < W - s, col >= s]
    masks = jnp.stack(base, axis=0).astype(jnp.float32)                # (4*half, hw)
    masks = jnp.tile(masks, (1, nb))                                   # (4*half, L)

    # --- layout plumbing: channels on sublanes, flattened spatial on lanes ---
    x_cl = jnp.transpose(x_nchw, (1, 0, 2, 3)).reshape(cin, N * hw).astype(jnp.float32)

    body = functools.partial(_sll_kernel, W=W, L=L, ksz=ksz, cin=cin, inner=inner)

    compiler_kwargs = dict(dimension_semantics=("parallel",))
    if vmem_est > 12 * 1024 * 1024:   # above v5e's 16 MiB scoped default (w/ margin)
        compiler_kwargs["vmem_limit_bytes"] = int(min(vmem_est * 3 // 2,
                                                      96 * 1024 * 1024))

    out_cl = pl.pallas_call(
        body,
        out_shape=jax.ShapeDtypeStruct((cin, N * hw), jnp.float32),
        grid_spec=pltpu.PrefetchScalarGridSpec(
            num_scalar_prefetch=0,
            grid=(G,),
            in_specs=[
                pl.BlockSpec((cin, L), lambda g: (0, g)),
                pl.BlockSpec((inner, taps * cin), lambda g: (0, 0)),
                pl.BlockSpec((cin, taps * inner), lambda g: (0, 0)),
                pl.BlockSpec((inner, 1), lambda g: (0, 0)),
                pl.BlockSpec((4 * half, L), lambda g: (0, 0)),
            ],
            out_specs=pl.BlockSpec((cin, L), lambda g: (0, g)),
            scratch_shapes=[
                pltpu.VMEM((taps * cin, L), jnp.float32),   # conv1 im2col stack
                pltpu.VMEM((taps * inner, L), jnp.float32), # conv2 im2col stack
            ],
        ),
        compiler_params=pltpu.CompilerParams(**compiler_kwargs),
    )(x_cl, k1f, k2f, bf, masks)

    out = out_cl.reshape(cin, N, H, W).transpose(1, 0, 2, 3)
    return out.astype(x_nchw.dtype)


# -------------------------------- pure-JAX reference -----------------------------

def sll_forward_ref(x_nchw, kernel, bias, q):
    t = compute_t(kernel, q).reshape(1, -1, 1, 1)
    res = lax.conv_general_dilated(
        x_nchw, kernel, (1, 1), [(1, 1), (1, 1)],
        dimension_numbers=("NCHW", "OIHW", "NCHW"),
        precision=lax.Precision.HIGHEST)
    res = res + bias.reshape(1, -1, 1, 1)
    res = t * jnp.maximum(res, 0.0)
    # conv_transpose2d(res, W, padding=1) == conv2d(res, W_flipped_swapped, padding=1)
    kt = jnp.transpose(jnp.flip(kernel, axis=(2, 3)), (1, 0, 2, 3))
    res2 = lax.conv_general_dilated(
        res, kt, (1, 1), [(1, 1), (1, 1)],
        dimension_numbers=("NCHW", "OIHW", "NCHW"),
        precision=lax.Precision.HIGHEST)
    return x_nchw - 2.0 * res2


# ------------------------------------- main --------------------------------------

if __name__ == "__main__":
    # Module hyperparameters (small, consistent with the PyTorch module).
    cin, inner_dim_factor, ksz = 4, 2.0, 3
    inner = int(cin * inner_dim_factor)          # 8
    N, H, W = 2, 16, 16

    key = jax.random.PRNGKey(0)
    k_kern, k_bias, k_q, k_x = jax.random.split(key, 4)

    # Deterministic parameter init mirroring the module's __init__:
    #   kernel ~ xavier_normal_, bias ~ U(-1/sqrt(fan_in), 1/sqrt(fan_in)), q ~ N(0,1)
    fan_in = cin * ksz * ksz
    fan_out = inner * ksz * ksz
    xavier_std = math.sqrt(2.0 / (fan_in + fan_out))
    kernel = jax.random.normal(k_kern, (inner, cin, ksz, ksz), jnp.float32) * xavier_std
    bound = 1.0 / math.sqrt(fan_in)
    bias = jax.random.uniform(k_bias, (inner,), jnp.float32, -bound, bound)
    q = jax.random.normal(k_q, (inner,), jnp.float32)

    x = jax.random.normal(k_x, (N, cin, H, W), jnp.float32)

    out = jax.block_until_ready(sll_forward(x, kernel, bias, q))
    ref = jax.block_until_ready(sll_forward_ref(x, kernel, bias, q))

    max_err = float(jnp.max(jnp.abs(out - ref)))
    assert out.shape == (N, cin, H, W)
    assert max_err < 1e-3, f"max abs error {max_err}"
    print("KERNEL_OK")
</pallas_src>

<mosaic_0001>
module attributes {stable_mosaic.version = 11 : i64} {
  func.func @_sll_kernel(%arg0: i32, %arg1: memref<4x256xf32, #tpu.memory_space<vmem>>, %arg2: memref<8x36xf32, #tpu.memory_space<vmem>>, %arg3: memref<4x72xf32, #tpu.memory_space<vmem>>, %arg4: memref<8x1xf32, #tpu.memory_space<vmem>>, %arg5: memref<4x256xf32, #tpu.memory_space<vmem>>, %arg6: memref<4x256xf32, #tpu.memory_space<vmem>>, %arg7: memref<36x256xf32, #tpu.memory_space<vmem>>, %arg8: memref<72x256xf32, #tpu.memory_space<vmem>>) attributes {dimension_semantics = [#tpu.dimension_semantics<parallel>], iteration_bounds = array<i64: 2>, scalar_prefetch = 0 : i64, scratch_operands = 2 : i64, tpu.core_type = #tpu.core_type<tc>, window_params = [{transform_indices = @transform_0, window_bounds = array<i64: 4, 256>}, {pipeline_mode = #tpu.pipeline_mode<synchronous>, transform_indices = @transform_1, window_bounds = array<i64: 8, 36>}, {pipeline_mode = #tpu.pipeline_mode<synchronous>, transform_indices = @transform_2, window_bounds = array<i64: 4, 72>}, {pipeline_mode = #tpu.pipeline_mode<synchronous>, transform_indices = @transform_3, window_bounds = array<i64: 8, 1>}, {pipeline_mode = #tpu.pipeline_mode<synchronous>, transform_indices = @transform_4, window_bounds = array<i64: 4, 256>}, {transform_indices = @transform_5, window_bounds = array<i64: 4, 256>}]} {
    %c0 = arith.constant 0 : index
    %c0_0 = arith.constant 0 : index
    %0 = vector.load %arg1[%c0, %c0_0] : memref<4x256xf32, #tpu.memory_space<vmem>>, vector<4x256xf32>
    %c17_i32 = arith.constant 17 : i32
    %1 = tpu.dynamic_rotate %0 by %c17_i32 dim 1 : vector<4x256xf32>, i32 -> vector<4x256xf32>
    %c1 = arith.constant 1 : index
    %c0_1 = arith.constant 0 : index
    %2 = vector.load %arg5[%c1, %c0_1] : memref<4x256xf32, #tpu.memory_space<vmem>>, vector<1x256xf32>
    %c3 = arith.constant 3 : index
    %c0_2 = arith.constant 0 : index
    %3 = vector.load %arg5[%c3, %c0_2] : memref<4x256xf32, #tpu.memory_space<vmem>>, vector<1x256xf32>
    %4 = arith.mulf %2, %3 : vector<1x256xf32>
    %5 = vector.broadcast %4 : vector<1x256xf32> to vector<4x256xf32>
    %6 = arith.mulf %1, %5 : vector<4x256xf32>
    %c0_3 = arith.constant 0 : index
    %c0_4 = arith.constant 0 : index
    %7 = vector.load %arg7[%c0_3, %c0_4] : memref<36x256xf32, #tpu.memory_space<vmem>>, vector<4x256xf32>
    tpu.vector_store %arg7[%c0_3, %c0_4], %6 {strides = array<i32>} : memref<36x256xf32, #tpu.memory_space<vmem>>, vector<4x256xf32>,
    %c16_i32 = arith.constant 16 : i32
    %8 = tpu.dynamic_rotate %0 by %c16_i32 dim 1 : vector<4x256xf32>, i32 -> vector<4x256xf32>
    %c1_5 = arith.constant 1 : index
    %c0_6 = arith.constant 0 : index
    %9 = vector.load %arg5[%c1_5, %c0_6] : memref<4x256xf32, #tpu.memory_space<vmem>>, vector<1x256xf32>
    %10 = vector.broadcast %9 : vector<1x256xf32> to vector<4x256xf32>
    %11 = arith.mulf %8, %10 : vector<4x256xf32>
    %c4 = arith.constant 4 : index
    %c0_7 = arith.constant 0 : index
    %12 = vector.load %arg7[%c4, %c0_7] : memref<36x256xf32, #tpu.memory_space<vmem>>, vector<4x256xf32>
    tpu.vector_store %arg7[%c4, %c0_7], %11 {strides = array<i32>} : memref<36x256xf32, #tpu.memory_space<vmem>>, vector<4x256xf32>,
    %c15_i32 = arith.constant 15 : i32
    %13 = tpu.dynamic_rotate %0 by %c15_i32 dim 1 : vector<4x256xf32>, i32 -> vector<4x256xf32>
    %c1_8 = arith.constant 1 : index
    %c0_9 = arith.constant 0 : index
    %14 = vector.load %arg5[%c1_8, %c0_9] : memref<4x256xf32, #tpu.memory_space<vmem>>, vector<1x256xf32>
    %c2 = arith.constant 2 : index
    %c0_10 = arith.constant 0 : index
    %15 = vector.load %arg5[%c2, %c0_10] : memref<4x256xf32, #tpu.memory_space<vmem>>, vector<1x256xf32>
    %16 = arith.mulf %14, %15 : vector<1x256xf32>
    %17 = vector.broadcast %16 : vector<1x256xf32> to vector<4x256xf32>
    %18 = arith.mulf %13, %17 : vector<4x256xf32>
    %c8 = arith.constant 8 : index
    %c0_11 = arith.constant 0 : index
    %19 = vector.load %arg7[%c8, %c0_11] : memref<36x256xf32, #tpu.memory_space<vmem>>, vector<4x256xf32>
    tpu.vector_store %arg7[%c8, %c0_11], %18 {strides = array<i32>} : memref<36x256xf32, #tpu.memory_space<vmem>>, vector<4x256xf32>,
    %c1_i32 = arith.constant 1 : i32
    %20 = tpu.dynamic_rotate %0 by %c1_i32 dim 1 : vector<4x256xf32>, i32 -> vector<4x256xf32>
    %c3_12 = arith.constant 3 : index
    %c0_13 = arith.constant 0 : index
    %21 = vector.load %arg5[%c3_12, %c0_13] : memref<4x256xf32, #tpu.memory_space<vmem>>, vector<1x256xf32>
    %22 = vector.broadcast %21 : vector<1x256xf32> to vector<4x256xf32>
    %23 = arith.mulf %20, %22 : vector<4x256xf32>
    %c12 = arith.constant 12 : index
    %c0_14 = arith.constant 0 : index
    %24 = vector.load %arg7[%c12, %c0_14] : memref<36x256xf32, #tpu.memory_space<vmem>>, vector<4x256xf32>
    tpu.vector_store %arg7[%c12, %c0_14], %23 {strides = array<i32>} : memref<36x256xf32, #tpu.memory_space<vmem>>, vector<4x256xf32>,
    %c16 = arith.constant 16 : index
    %c0_15 = arith.constant 0 : index
    %25 = vector.load %arg7[%c16, %c0_15] : memref<36x256xf32, #tpu.memory_space<vmem>>, vector<4x256xf32>
    tpu.vector_store %arg7[%c16, %c0_15], %0 {strides = array<i32>} : memref<36x256xf32, #tpu.memory_space<vmem>>, vector<4x256xf32>,
    %c255_i32 = arith.constant 255 : i32
    %26 = tpu.dynamic_rotate %0 by %c255_i32 dim 1 : vector<4x256xf32>, i32 -> vector<4x256xf32>
    %c2_16 = arith.constant 2 : index
    %c0_17 = arith.constant 0 : index
    %27 = vector.load %arg5[%c2_16, %c0_17] : memref<4x256xf32, #tpu.memory_space<vmem>>, vector<1x256xf32>
    %28 = vector.broadcast %27 : vector<1x256xf32> to vector<4x256xf32>
    %29 = arith.mulf %26, %28 : vector<4x256xf32>
    %c20 = arith.constant 20 : index
    %c0_18 = arith.constant 0 : index
    %30 = vector.load %arg7[%c20, %c0_18] : memref<36x256xf32, #tpu.memory_space<vmem>>, vector<4x256xf32>
    tpu.vector_store %arg7[%c20, %c0_18], %29 {strides = array<i32>} : memref<36x256xf32, #tpu.memory_space<vmem>>, vector<4x256xf32>,
    %c241_i32 = arith.constant 241 : i32
    %31 = tpu.dynamic_rotate %0 by %c241_i32 dim 1 : vector<4x256xf32>, i32 -> vector<4x256xf32>
    %c0_19 = arith.constant 0 : index
    %c0_20 = arith.constant 0 : index
    %32 = vector.load %arg5[%c0_19, %c0_20] : memref<4x256xf32, #tpu.memory_space<vmem>>, vector<1x256xf32>
    %c3_21 = arith.constant 3 : index
    %c0_22 = arith.constant 0 : index
    %33 = vector.load %arg5[%c3_21, %c0_22] : memref<4x256xf32, #tpu.memory_space<vmem>>, vector<1x256xf32>
    %34 = arith.mulf %32, %33 : vector<1x256xf32>
    %35 = vector.broadcast %34 : vector<1x256xf32> to vector<4x256xf32>
    %36 = arith.mulf %31, %35 : vector<4x256xf32>
    %c24 = arith.constant 24 : index
    %c0_23 = arith.constant 0 : index
    %37 = vector.load %arg7[%c24, %c0_23] : memref<36x256xf32, #tpu.memory_space<vmem>>, vector<4x256xf32>
    tpu.vector_store %arg7[%c24, %c0_23], %36 {strides = array<i32>} : memref<36x256xf32, #tpu.memory_space<vmem>>, vector<4x256xf32>,
    %c240_i32 = arith.constant 240 : i32
    %38 = tpu.dynamic_rotate %0 by %c240_i32 dim 1 : vector<4x256xf32>, i32 -> vector<4x256xf32>
    %c0_24 = arith.constant 0 : index
    %c0_25 = arith.constant 0 : index
    %39 = vector.load %arg5[%c0_24, %c0_25] : memref<4x256xf32, #tpu.memory_space<vmem>>, vector<1x256xf32>
    %40 = vector.broadcast %39 : vector<1x256xf32> to vector<4x256xf32>
    %41 = arith.mulf %38, %40 : vector<4x256xf32>
    %c28 = arith.constant 28 : index
    %c0_26 = arith.constant 0 : index
    %42 = vector.load %arg7[%c28, %c0_26] : memref<36x256xf32, #tpu.memory_space<vmem>>, vector<4x256xf32>
    tpu.vector_store %arg7[%c28, %c0_26], %41 {strides = array<i32>} : memref<36x256xf32, #tpu.memory_space<vmem>>, vector<4x256xf32>,
    %c239_i32 = arith.constant 239 : i32
    %43 = tpu.dynamic_rotate %0 by %c239_i32 dim 1 : vector<4x256xf32>, i32 -> vector<4x256xf32>
    %c0_27 = arith.constant 0 : index
    %c0_28 = arith.constant 0 : index
    %44 = vector.load %arg5[%c0_27, %c0_28] : memref<4x256xf32, #tpu.memory_space<vmem>>, vector<1x256xf32>
    %c2_29 = arith.constant 2 : index
    %c0_30 = arith.constant 0 : index
    %45 = vector.load %arg5[%c2_29, %c0_30] : memref<4x256xf32, #tpu.memory_space<vmem>>, vector<1x256xf32>
    %46 = arith.mulf %44, %45 : vector<1x256xf32>
    %47 = vector.broadcast %46 : vector<1x256xf32> to vector<4x256xf32>
    %48 = arith.mulf %43, %47 : vector<4x256xf32>
    %c32 = arith.constant 32 : index
    %c0_31 = arith.constant 0 : index
    %49 = vector.load %arg7[%c32, %c0_31] : memref<36x256xf32, #tpu.memory_space<vmem>>, vector<4x256xf32>
    tpu.vector_store %arg7[%c32, %c0_31], %48 {strides = array<i32>} : memref<36x256xf32, #tpu.memory_space<vmem>>, vector<4x256xf32>,
    %c0_32 = arith.constant 0 : index
    %c0_33 = arith.constant 0 : index
    %50 = vector.load %arg2[%c0_32, %c0_33] : memref<8x36xf32, #tpu.memory_space<vmem>>, vector<8x36xf32>
    %c0_34 = arith.constant 0 : index
    %c0_35 = arith.constant 0 : index
    %51 = vector.load %arg7[%c0_34, %c0_35] : memref<36x256xf32, #tpu.memory_space<vmem>>, vector<36x256xf32>
    %cst = arith.constant dense<0.000000e+00> : vector<8x256xf32>
    %52 = tpu.matmul %50, %51, %cst {dimension_numbers = #tpu.dot_dimension_numbers<[1], [0], [0], [1], [0, 0, 1, 1], [], []>} : vector<8x36xf32>, vector<36x256xf32>, vector<8x256xf32> -> vector<8x256xf32>
    %c0_36 = arith.constant 0 : index
    %c0_37 = arith.constant 0 : index
    %53 = vector.load %arg4[%c0_36, %c0_37] : memref<8x1xf32, #tpu.memory_space<vmem>>, vector<8x1xf32>
    %54 = vector.broadcast %53 : vector<8x1xf32> to vector<8x256xf32>
    %55 = arith.addf %52, %54 : vector<8x256xf32>
    %cst_38 = arith.constant 0.000000e+00 : f32
    %56 = vector.broadcast %cst_38 : f32 to vector<8x256xf32>
    %57 = arith.maximumf %55, %56 : vector<8x256xf32>
    %c17_i32_39 = arith.constant 17 : i32
    %58 = tpu.dynamic_rotate %57 by %c17_i32_39 dim 1 : vector<8x256xf32>, i32 -> vector<8x256xf32>
    %c1_40 = arith.constant 1 : index
    %c0_41 = arith.constant 0 : index
    %59 = vector.load %arg5[%c1_40, %c0_41] : memref<4x256xf32, #tpu.memory_space<vmem>>, vector<1x256xf32>
    %c3_42 = arith.constant 3 : index
    %c0_43 = arith.constant 0 : index
    %60 = vector.load %arg5[%c3_42, %c0_43] : memref<4x256xf32, #tpu.memory_space<vmem>>, vector<1x256xf32>
    %61 = arith.mulf %59, %60 : vector<1x256xf32>
    %62 = vector.broadcast %61 : vector<1x256xf32> to vector<8x256xf32>
    %63 = arith.mulf %58, %62 : vector<8x256xf32>
    %c0_44 = arith.constant 0 : index
    %c0_45 = arith.constant 0 : index
    %64 = vector.load %arg8[%c0_44, %c0_45] : memref<72x256xf32, #tpu.memory_space<vmem>>, vector<8x256xf32>
    tpu.vector_store %arg8[%c0_44, %c0_45], %63 {strides = array<i32>} : memref<72x256xf32, #tpu.memory_space<vmem>>, vector<8x256xf32>,
    %c16_i32_46 = arith.constant 16 : i32
    %65 = tpu.dynamic_rotate %57 by %c16_i32_46 dim 1 : vector<8x256xf32>, i32 -> vector<8x256xf32>
    %c1_47 = arith.constant 1 : index
    %c0_48 = arith.constant 0 : index
    %66 = vector.load %arg5[%c1_47, %c0_48] : memref<4x256xf32, #tpu.memory_space<vmem>>, vector<1x256xf32>
    %67 = vector.broadcast %66 : vector<1x256xf32> to vector<8x256xf32>
    %68 = arith.mulf %65, %67 : vector<8x256xf32>
    %c8_49 = arith.constant 8 : index
    %c0_50 = arith.constant 0 : index
    %69 = vector.load %arg8[%c8_49, %c0_50] : memref<72x256xf32, #tpu.memory_space<vmem>>, vector<8x256xf32>
    tpu.vector_store %arg8[%c8_49, %c0_50], %68 {strides = array<i32>} : memref<72x256xf32, #tpu.memory_space<vmem>>, vector<8x256xf32>,
    %c15_i32_51 = arith.constant 15 : i32
    %70 = tpu.dynamic_rotate %57 by %c15_i32_51 dim 1 : vector<8x256xf32>, i32 -> vector<8x256xf32>
    %c1_52 = arith.constant 1 : index
    %c0_53 = arith.constant 0 : index
    %71 = vector.load %arg5[%c1_52, %c0_53] : memref<4x256xf32, #tpu.memory_space<vmem>>, vector<1x256xf32>
    %c2_54 = arith.constant 2 : index
    %c0_55 = arith.constant 0 : index
    %72 = vector.load %arg5[%c2_54, %c0_55] : memref<4x256xf32, #tpu.memory_space<vmem>>, vector<1x256xf32>
    %73 = arith.mulf %71, %72 : vector<1x256xf32>
    %74 = vector.broadcast %73 : vector<1x256xf32> to vector<8x256xf32>
    %75 = arith.mulf %70, %74 : vector<8x256xf32>
    %c16_56 = arith.constant 16 : index
    %c0_57 = arith.constant 0 : index
    %76 = vector.load %arg8[%c16_56, %c0_57] : memref<72x256xf32, #tpu.memory_space<vmem>>, vector<8x256xf32>
    tpu.vector_store %arg8[%c16_56, %c0_57], %75 {strides = array<i32>} : memref<72x256xf32, #tpu.memory_space<vmem>>, vector<8x256xf32>,
    %c1_i32_58 = arith.constant 1 : i32
    %77 = tpu.dynamic_rotate %57 by %c1_i32_58 dim 1 : vector<8x256xf32>, i32 -> vector<8x256xf32>
    %c3_59 = arith.constant 3 : index
    %c0_60 = arith.constant 0 : index
    %78 = vector.load %arg5[%c3_59, %c0_60] : memref<4x256xf32, #tpu.memory_space<vmem>>, vector<1x256xf32>
    %79 = vector.broadcast %78 : vector<1x256xf32> to vector<8x256xf32>
    %80 = arith.mulf %77, %79 : vector<8x256xf32>
    %c24_61 = arith.constant 24 : index
    %c0_62 = arith.constant 0 : index
    %81 = vector.load %arg8[%c24_61, %c0_62] : memref<72x256xf32, #tpu.memory_space<vmem>>, vector<8x256xf32>
    tpu.vector_store %arg8[%c24_61, %c0_62], %80 {strides = array<i32>} : memref<72x256xf32, #tpu.memory_space<vmem>>, vector<8x256xf32>,
    %c32_63 = arith.constant 32 : index
    %c0_64 = arith.constant 0 : index
    %82 = vector.load %arg8[%c32_63, %c0_64] : memref<72x256xf32, #tpu.memory_space<vmem>>, vector<8x256xf32>
    tpu.vector_store %arg8[%c32_63, %c0_64], %57 {strides = array<i32>} : memref<72x256xf32, #tpu.memory_space<vmem>>, vector<8x256xf32>,
    %c255_i32_65 = arith.constant 255 : i32
    %83 = tpu.dynamic_rotate %57 by %c255_i32_65 dim 1 : vector<8x256xf32>, i32 -> vector<8x256xf32>
    %c2_66 = arith.constant 2 : index
    %c0_67 = arith.constant 0 : index
    %84 = vector.load %arg5[%c2_66, %c0_67] : memref<4x256xf32, #tpu.memory_space<vmem>>, vector<1x256xf32>
    %85 = vector.broadcast %84 : vector<1x256xf32> to vector<8x256xf32>
    %86 = arith.mulf %83, %85 : vector<8x256xf32>
    %c40 = arith.constant 40 : index
    %c0_68 = arith.constant 0 : index
    %87 = vector.load %arg8[%c40, %c0_68] : memref<72x256xf32, #tpu.memory_space<vmem>>, vector<8x256xf32>
    tpu.vector_store %arg8[%c40, %c0_68], %86 {strides = array<i32>} : memref<72x256xf32, #tpu.memory_space<vmem>>, vector<8x256xf32>,
    %c241_i32_69 = arith.constant 241 : i32
    %88 = tpu.dynamic_rotate %57 by %c241_i32_69 dim 1 : vector<8x256xf32>, i32 -> vector<8x256xf32>
    %c0_70 = arith.constant 0 : index
    %c0_71 = arith.constant 0 : index
    %89 = vector.load %arg5[%c0_70, %c0_71] : memref<4x256xf32, #tpu.memory_space<vmem>>, vector<1x256xf32>
    %c3_72 = arith.constant 3 : index
    %c0_73 = arith.constant 0 : index
    %90 = vector.load %arg5[%c3_72, %c0_73] : memref<4x256xf32, #tpu.memory_space<vmem>>, vector<1x256xf32>
    %91 = arith.mulf %89, %90 : vector<1x256xf32>
    %92 = vector.broadcast %91 : vector<1x256xf32> to vector<8x256xf32>
    %93 = arith.mulf %88, %92 : vector<8x256xf32>
    %c48 = arith.constant 48 : index
    %c0_74 = arith.constant 0 : index
    %94 = vector.load %arg8[%c48, %c0_74] : memref<72x256xf32, #tpu.memory_space<vmem>>, vector<8x256xf32>
    tpu.vector_store %arg8[%c48, %c0_74], %93 {strides = array<i32>} : memref<72x256xf32, #tpu.memory_space<vmem>>, vector<8x256xf32>,
    %c240_i32_75 = arith.constant 240 : i32
    %95 = tpu.dynamic_rotate %57 by %c240_i32_75 dim 1 : vector<8x256xf32>, i32 -> vector<8x256xf32>
    %c0_76 = arith.constant 0 : index
    %c0_77 = arith.constant 0 : index
    %96 = vector.load %arg5[%c0_76, %c0_77] : memref<4x256xf32, #tpu.memory_space<vmem>>, vector<1x256xf32>
    %97 = vector.broadcast %96 : vector<1x256xf32> to vector<8x256xf32>
    %98 = arith.mulf %95, %97 : vector<8x256xf32>
    %c56 = arith.constant 56 : index
    %c0_78 = arith.constant 0 : index
    %99 = vector.load %arg8[%c56, %c0_78] : memref<72x256xf32, #tpu.memory_space<vmem>>, vector<8x256xf32>
    tpu.vector_store %arg8[%c56, %c0_78], %98 {strides = array<i32>} : memref<72x256xf32, #tpu.memory_space<vmem>>, vector<8x256xf32>,
    %c239_i32_79 = arith.constant 239 : i32
    %100 = tpu.dynamic_rotate %57 by %c239_i32_79 dim 1 : vector<8x256xf32>, i32 -> vector<8x256xf32>
    %c0_80 = arith.constant 0 : index
    %c0_81 = arith.constant 0 : index
    %101 = vector.load %arg5[%c0_80, %c0_81] : memref<4x256xf32, #tpu.memory_space<vmem>>, vector<1x256xf32>
    %c2_82 = arith.constant 2 : index
    %c0_83 = arith.constant 0 : index
    %102 = vector.load %arg5[%c2_82, %c0_83] : memref<4x256xf32, #tpu.memory_space<vmem>>, vector<1x256xf32>
    %103 = arith.mulf %101, %102 : vector<1x256xf32>
    %104 = vector.broadcast %103 : vector<1x256xf32> to vector<8x256xf32>
    %105 = arith.mulf %100, %104 : vector<8x256xf32>
    %c64 = arith.constant 64 : index
    %c0_84 = arith.constant 0 : index
    %106 = vector.load %arg8[%c64, %c0_84] : memref<72x256xf32, #tpu.memory_space<vmem>>, vector<8x256xf32>
    tpu.vector_store %arg8[%c64, %c0_84], %105 {strides = array<i32>} : memref<72x256xf32, #tpu.memory_space<vmem>>, vector<8x256xf32>,
    %c0_85 = arith.constant 0 : index
    %c0_86 = arith.constant 0 : index
    %107 = vector.load %arg3[%c0_85, %c0_86] : memref<4x72xf32, #tpu.memory_space<vmem>>, vector<4x72xf32>
    %c0_87 = arith.constant 0 : index
    %c0_88 = arith.constant 0 : index
    %108 = vector.load %arg8[%c0_87, %c0_88] : memref<72x256xf32, #tpu.memory_space<vmem>>, vector<72x256xf32>
    %cst_89 = arith.constant dense<0.000000e+00> : vector<4x256xf32>
    %109 = tpu.matmul %107, %108, %cst_89 {dimension_numbers = #tpu.dot_dimension_numbers<[1], [0], [0], [1], [0, 0, 1, 1], [], []>} : vector<4x72xf32>, vector<72x256xf32>, vector<4x256xf32> -> vector<4x256xf32>
    %110 = arith.addf %0, %109 : vector<4x256xf32>
    %c0_90 = arith.constant 0 : index
    %c0_91 = arith.constant 0 : index
    %111 = vector.load %arg6[%c0_90, %c0_91] : memref<4x256xf32, #tpu.memory_space<vmem>>, vector<4x256xf32>
    tpu.vector_store %arg6[%c0_90, %c0_91], %110 {strides = array<i32>} : memref<4x256xf32, #tpu.memory_space<vmem>>, vector<4x256xf32>,
    return
  }
  func.func @transform_0(%arg0: i32) -> (i32, i32) {
    %c0_i32 = arith.constant 0 : i32
    %c0_i32_0 = arith.constant 0 : i32
    return %c0_i32, %arg0 : i32, i32
  }
  func.func @transform_1(%arg0: i32) -> (i32, i32) {
    %c0_i32 = arith.constant 0 : i32
    %c0_i32_0 = arith.constant 0 : i32
    %c0_i32_1 = arith.constant 0 : i32
    return %c0_i32, %c0_i32_0 : i32, i32
  }
  func.func @transform_2(%arg0: i32) -> (i32, i32) {
    %c0_i32 = arith.constant 0 : i32
    %c0_i32_0 = arith.constant 0 : i32
    %c0_i32_1 = arith.constant 0 : i32
    return %c0_i32, %c0_i32_0 : i32, i32
  }
  func.func @transform_3(%arg0: i32) -> (i32, i32) {
    %c0_i32 = arith.constant 0 : i32
    %c0_i32_0 = arith.constant 0 : i32
    %c0_i32_1 = arith.constant 0 : i32
    return %c0_i32, %c0_i32_0 : i32, i32
  }
  func.func @transform_4(%arg0: i32) -> (i32, i32) {
    %c0_i32 = arith.constant 0 : i32
    %c0_i32_0 = arith.constant 0 : i32
    %c0_i32_1 = arith.constant 0 : i32
    return %c0_i32, %c0_i32_0 : i32, i32
  }
  func.func @transform_5(%arg0: i32) -> (i32, i32) {
    %c0_i32 = arith.constant 0 : i32
    %c0_i32_0 = arith.constant 0 : i32
    return %c0_i32, %arg0 : i32, i32
  }
}

</mosaic_0001>

<llo_original>
// kernel: tpu_custom_call.1
$region0: #{tpu_custom_call.1}
  #allocation0 [shape = 'u32[]', space=smem, size = 0x4, offset = 0x4, fixed_abs, tag = 'smem constant byte address 0x4 - core index']
  #allocation1 [shape = 'u32[72,128]{1,0:T(1,128)}', space=vmem, size = 0x9000, scoped, tag = 'internal scratch']
  #allocation2 [shape = 'f32[36,256]{1,0:T(8,128)}', space=vmem, size = 0xa000, scoped, tag = 'scratch operand']
  #allocation3 [shape = 'f32[72,256]{1,0:T(8,128)}', space=vmem, size = 0x12000, scoped, tag = 'scratch operand']
  %s0 = inlined_call_operand.hbm [shape: f32[4,512], index: 0, kind: input, shape index: {}]
  %s1 = inlined_call_operand.vmem [shape: f32[8,36], index: 1, kind: input, shape index: {}]
  %s2 = inlined_call_operand.hbm [shape: f32[4,72], index: 2, kind: input, shape index: {}]
  %s3 = inlined_call_operand.vmem [shape: f32[8,1], index: 3, kind: input, shape index: {}]
  %s4 = inlined_call_operand.hbm [shape: f32[4,256], index: 4, kind: input, shape index: {}]
  %s5 = inlined_call_operand.hbm [shape: f32[4,512], index: 5, kind: output, shape index: {}]
  %s6 = sld [smem:[#allocation0]]
  $region65: #{tpu_custom_call.1} parent=0
    _
  %s8 = ssub.s32 1, %s6
  %s9 = scalar_select 0, %s8, %s6
  $region1: #{tpu_custom_call.1} parent=0
    #allocation4 [shape = 'u8[8192]{0}', space=vmem, size = 0x2000, scoped, tag = 'input window, operand 0']
    #allocation5 [shape = 's32[2]{0}', space=sflag, size = 0x8, scoped, tag = 'scoped memory for tpu_custom_call.1']
    #allocation6 [shape = 's32[2]{0}', space=sflag, size = 0x8, scoped, tag = 'scoped memory for tpu_custom_call.1']
    #allocation7 [shape = 'u8[2048]{0}', space=vmem, size = 0x800, scoped, tag = 'input window, operand 2, single buffered']
    #allocation8 [shape = 's32[1]{0}', space=sflag, size = 0x4, scoped, tag = 'scoped memory for tpu_custom_call.1']
    #allocation9 [shape = 'u8[4096]{0}', space=vmem, size = 0x1000, scoped, tag = 'input window, operand 4, single buffered']
    #allocation10 [shape = 'u8[8192]{0}', space=vmem, size = 0x2000, scoped, tag = 'output window, operand 0']
    %10 = vsyncpa [#allocation5], 0
    %s11 = scalar_lea.sflag [#allocation5], 1
    %12 = vsyncpa %s11, 0
    %13 = vsyncpa [#allocation8], 0
    %14 = vsyncpa [#allocation6], 0
    %s15 = scalar_lea.sflag [#allocation6], 1
    %16 = vsyncpa %s15, 0
    loop: start=0, step=1, limit=4
    $region2: #{tpu_custom_call.1} parent=1 // loop_pre_header
      _
    $region3: #{tpu_custom_call.1} parent=1 // loop_header
      %s18 = sphi 0, %s22
      %p19 = scmp.ge.s32.totalorder %s18, 4
      %s28 = sphi 0, %s30
      %s31 = sphi 0, %s28
      %s32 = sphi 0, %s31
      %s48 = sphi 0, %s32
      %s52 = sphi 0, %s52
      %s54 = sphi 0, %s52
      %s55 = sphi 0, %s54
      %s69 = sphi 0, %s55
      %s73 = sphi 0, %s73
      %s75 = sphi 0, %s73
      %s76 = sphi 0, %s75
      %s90 = sphi 0, %s76
      %s94 = sphi 0, %s94
      %s96 = sphi 0, %s94
      %s97 = sphi 0, %s96
      %s111 = sphi 0, %s97
      %s115 = sphi 0, %s115
      %s117 = sphi 0, %s115
      %s118 = sphi 0, %s117
      %s132 = sphi 0, %s118
      %s138 = sphi 0, %s140
      %s141 = sphi 0, %s138
      %s142 = sphi 0, %s141
      %s158 = sphi 0, %s142
    $region4: #{tpu_custom_call.1} parent=1 // loop_header_branch
      %21 = sbr.rel (%p19) target = $region8
    $region5: #{tpu_custom_call.1} parent=1 // loop_body
      %s23 = ssub.s32 %s18, 1
      %s24 = ssub.s32 %s18, 2
      %s25 = sadd.s32 %s18, 1
      %s26 = ssub.s32 %s18, %s25
      %p27 = scmp.eq.s32.totalorder %s26, 0
      %s29 = sadd.s32 %s28, 1
      %s30 = scalar_select %p27, %s28, %s29
      %p33 = pneg %p27
      %p34 = scmp.eq.s32.totalorder %s18, 1
      %p35 = por %p33, %p34
      %p36 = scmp.ne.s32.totalorder %s28, %s31
      %p37 = scmp.eq.s32.totalorder %s18, 0
      %p38 = por %p36, %p37
      %p39 = scmp.ne.s32.totalorder %s28, %s31
      %p40 = scmp.eq.s32.totalorder %s23, 1
      %p41 = por %p39, %p40
      %p42 = scmp.ne.s32.totalorder %s31, %s32
      %p43 = scmp.eq.s32.totalorder %s23, 0
      %p44 = por %p42, %p43
      %p45 = scmp.ne.s32.totalorder %s31, %s32
      %p46 = scmp.eq.s32.totalorder %s24, 1
      %p47 = por %p45, %p46
      %p49 = scmp.ne.s32.totalorder %s32, %s48
      %p50 = scmp.eq.s32.totalorder %s24, 0
      %p51 = por %p49, %p50
      %s53 = sadd.s32 %s52, 1
      %p56 = scmp.eq.s32.totalorder %s18, 1
      %p57 = scmp.ne.s32.totalorder %s52, %s54
      %p58 = scmp.eq.s32.totalorder %s18, 0
      %p59 = por %p57, %p58
      %p60 = scmp.ne.s32.totalorder %s52, %s54
      %p61 = scmp.eq.s32.totalorder %s23, 1
      %p62 = por %p60, %p61
      %p63 = scmp.ne.s32.totalorder %s54, %s55
      %p64 = scmp.eq.s32.totalorder %s23, 0
      %p65 = por %p63, %p64
      %p66 = scmp.ne.s32.totalorder %s54, %s55
      %p67 = scmp.eq.s32.totalorder %s24, 1
      %p68 = por %p66, %p67
      %p70 = scmp.ne.s32.totalorder %s55, %s69
      %p71 = scmp.eq.s32.totalorder %s24, 0
      %p72 = por %p70, %p71
      %s74 = sadd.s32 %s73, 1
      %p77 = scmp.eq.s32.totalorder %s18, 1
      %p78 = scmp.ne.s32.totalorder %s73, %s75
      %p79 = scmp.eq.s32.totalorder %s18, 0
      %p80 = por %p78, %p79
      %p81 = scmp.ne.s32.totalorder %s73, %s75
      %p82 = scmp.eq.s32.totalorder %s23, 1
      %p83 = por %p81, %p82
      %p84 = scmp.ne.s32.totalorder %s75, %s76
      %p85 = scmp.eq.s32.totalorder %s23, 0
      %p86 = por %p84, %p85
      %p87 = scmp.ne.s32.totalorder %s75, %s76
      %p88 = scmp.eq.s32.totalorder %s24, 1
      %p89 = por %p87, %p88
      %p91 = scmp.ne.s32.totalorder %s76, %s90
      %p92 = scmp.eq.s32.totalorder %s24, 0
      %p93 = por %p91, %p92
      %s95 = sadd.s32 %s94, 1
      %p98 = scmp.eq.s32.totalorder %s18, 1
      %p99 = scmp.ne.s32.totalorder %s94, %s96
      %p100 = scmp.eq.s32.totalorder %s18, 0
      %p101 = por %p99, %p100
      %p102 = scmp.ne.s32.totalorder %s94, %s96
      %p103 = scmp.eq.s32.totalorder %s23, 1
      %p104 = por %p102, %p103
      %p105 = scmp.ne.s32.totalorder %s96, %s97
      %p106 = scmp.eq.s32.totalorder %s23, 0
      %p107 = por %p105, %p106
      %p108 = scmp.ne.s32.totalorder %s96, %s97
      %p109 = scmp.eq.s32.totalorder %s24, 1
      %p110 = por %p108, %p109
      %p112 = scmp.ne.s32.totalorder %s97, %s111
      %p113 = scmp.eq.s32.totalorder %s24, 0
      %p114 = por %p112, %p113
      %s116 = sadd.s32 %s115, 1
      %p119 = scmp.eq.s32.totalorder %s18, 1
      %p120 = scmp.ne.s32.totalorder %s115, %s117
      %p121 = scmp.eq.s32.totalorder %s18, 0
      %p122 = por %p120, %p121
      %p123 = scmp.ne.s32.totalorder %s115, %s117
      %p124 = scmp.eq.s32.totalorder %s23, 1
      %p125 = por %p123, %p124
      %p126 = scmp.ne.s32.totalorder %s117, %s118
      %p127 = scmp.eq.s32.totalorder %s23, 0
      %p128 = por %p126, %p127
      %p129 = scmp.ne.s32.totalorder %s117, %s118
      %p130 = scmp.eq.s32.totalorder %s24, 1
      %p131 = por %p129, %p130
      %p133 = scmp.ne.s32.totalorder %s118, %s132
      %p134 = scmp.eq.s32.totalorder %s24, 0
      %p135 = por %p133, %p134
      %s136 = ssub.s32 %s18, %s25
      %p137 = scmp.eq.s32.totalorder %s136, 0
      %s139 = sadd.s32 %s138, 1
      %s140 = scalar_select %p137, %s138, %s139
      %p143 = pneg %p137
      %p144 = scmp.eq.s32.totalorder %s18, 1
      %p145 = por %p143, %p144
      %p146 = scmp.ne.s32.totalorder %s138, %s141
      %p147 = scmp.eq.s32.totalorder %s18, 0
      %p148 = por %p146, %p147
      %p149 = scmp.ne.s32.totalorder %s138, %s141
      %p150 = scmp.eq.s32.totalorder %s23, 1
      %p151 = por %p149, %p150
      %p152 = scmp.ne.s32.totalorder %s141, %s142
      %p153 = scmp.eq.s32.totalorder %s23, 0
      %p154 = por %p152, %p153
      %p155 = scmp.ne.s32.totalorder %s141, %s142
      %p156 = scmp.eq.s32.totalorder %s24, 1
      %p157 = por %p155, %p156
      %p159 = scmp.ne.s32.totalorder %s142, %s158
      %p160 = scmp.eq.s32.totalorder %s24, 0
      %p161 = por %p159, %p160
      %p162 = scmp.le.s32.totalorder 1, %s18
      %p163 = scmp.lt.s32.totalorder %s18, 3
      %p164 = pnand %p162, %p163
      %p165 = pneg %p164
      // Predicated region
      $region9: #{tpu_custom_call.1} parent=5 // pred_check
        _
      $region10: #{tpu_custom_call.1} parent=5 // pred_check_branch
        %167 = sbr.rel (%p164) target = $region12
      $region11: #{tpu_custom_call.1} parent=5 // pred_region
        %s168 = ssub.s32 %s18, 1
        // Predicated region
        $region13: #{tpu_custom_call.1} parent=11 // pred_check
          %p169 = pneg %p65
        $region14: #{tpu_custom_call.1} parent=11 // pred_check_branch
          %171 = sbr.rel (%p169) target = $region16
        $region15: #{tpu_custom_call.1} parent=11 // pred_region
          _
        $region16: #{tpu_custom_call.1} parent=11 // pred_fallthru
          _
        // Predicated region
        $region17: #{tpu_custom_call.1} parent=11 // pred_check
          %p172 = pneg %p86
        $region18: #{tpu_custom_call.1} parent=11 // pred_check_branch
          %174 = sbr.rel (%p172) target = $region20
        $region19: #{tpu_custom_call.1} parent=11 // pred_region
          %176 = vsyncadd [#allocation8], 0
          %s178 = sshll.u32 %s2, 4
          %s179 = int_to_ptr.hbm [resolvable:$true] %s178
          %s180 = sshll.u32 [#allocation7], 4
          %s181 = int_to_ptr.vmem [resolvable:$true] %s180
          %183 = dma.hbm_to_vmem [thread:$0]  %s179, 64, %s181, [#allocation8]
        $region20: #{tpu_custom_call.1} parent=11 // pred_fallthru
          _
        // Predicated region
        $region21: #{tpu_custom_call.1} parent=11 // pred_check
          %p184 = pneg %p107
        $region22: #{tpu_custom_call.1} parent=11 // pred_check_branch
          %186 = sbr.rel (%p184) target = $region24
        $region23: #{tpu_custom_call.1} parent=11 // pred_region
          _
        $region24: #{tpu_custom_call.1} parent=11 // pred_fallthru
          _
        // Predicated region
        $region25: #{tpu_custom_call.1} parent=11 // pred_check
          %p187 = pneg %p128
        $region26: #{tpu_custom_call.1} parent=11 // pred_check_branch
          %189 = sbr.rel (%p187) target = $region28
        $region27: #{tpu_custom_call.1} parent=11 // pred_region
          %191 = vsyncadd [#allocation8], 0
          %s193 = sshll.u32 %s4, 4
          %s194 = int_to_ptr.hbm [resolvable:$true] %s193
          %s195 = sshll.u32 [#allocation9], 4
          %s196 = int_to_ptr.vmem [resolvable:$true] %s195
          %198 = dma.hbm_to_vmem [thread:$0]  %s194, 128, %s196, [#allocation8]
        $region28: #{tpu_custom_call.1} parent=11 // pred_fallthru
          _
      $region12: #{tpu_custom_call.1} parent=5 // pred_fallthru
        _
      %p199 = scmp.lt.s32.totalorder %s18, 2
      // Predicated region
      $region29: #{tpu_custom_call.1} parent=5 // pred_check
        %p200 = pneg %p199
      $region30: #{tpu_custom_call.1} parent=5 // pred_check_branch
        %202 = sbr.rel (%p200) target = $region32
      $region31: #{tpu_custom_call.1} parent=5 // pred_region
        // Predicated region
        $region33: #{tpu_custom_call.1} parent=31 // pred_check
          %p203 = pneg %p38
        $region34: #{tpu_custom_call.1} parent=31 // pred_check_branch
          %205 = sbr.rel (%p203) target = $region36
        $region35: #{tpu_custom_call.1} parent=31 // pred_region
          %s206 = sand.u32 %s28, 1
          %s207 = scalar_lea.sflag [#allocation5], %s206
          %s208 = sand.u32 %s28, 1
          %s209 = smul.addr %s208, 8
          %s210 = scalar_lea.vmem [#allocation4], %s209
          %s211 = smul.u32 2, %s18
          %213 = vsyncadd %s207, 0
          %s214 = smul.addr %s211, 4
          %s215 = scalar_lea.hbm %s0, %s214
          %s217 = sshll.u32 %s215, 4
          %s218 = int_to_ptr.hbm [resolvable:$true] %s217
          %s219 = sshll.u32 %s210, 4
          %s220 = int_to_ptr.vmem [resolvable:$true] %s219
          %222 = dma.hbm_to_vmem [thread:$0]  %s218, 128, %s220, %s207
        $region36: #{tpu_custom_call.1} parent=31 // pred_fallthru
          _
      $region32: #{tpu_custom_call.1} parent=5 // pred_fallthru
        _
      %p223 = scmp.le.s32.totalorder 1, %s18
      %p224 = scmp.lt.s32.totalorder %s18, 3
      %p225 = pnand %p223, %p224
      %p226 = pneg %p225
      // Predicated region
      $region37: #{tpu_custom_call.1} parent=5 // pred_check
        _
      $region38: #{tpu_custom_call.1} parent=5 // pred_check_branch
        %228 = sbr.rel (%p225) target = $region40
      $region39: #{tpu_custom_call.1} parent=5 // pred_region
        %s229 = ssub.s32 %s18, 1
        %s230 = sand.u32 %s31, 1
        %s231 = scalar_lea.sflag [#allocation5], %s230
        %s232 = sand.u32 %s31, 1
        %s233 = smul.addr %s232, 8
        %s234 = scalar_lea.vmem [#allocation4], %s233
        // Predicated region
        $region41: #{tpu_custom_call.1} parent=39 // pred_check
          %p235 = pneg %p44
        $region42: #{tpu_custom_call.1} parent=39 // pred_check_branch
          %237 = sbr.rel (%p235) target = $region44
        $region43: #{tpu_custom_call.1} parent=39 // pred_region
          %239 = dma.done %s231, 128
        $region44: #{tpu_custom_call.1} parent=39 // pred_fallthru
          _
        // Predicated region
        $region45: #{tpu_custom_call.1} parent=39 // pred_check
          %p240 = pneg %p86
        $region46: #{tpu_custom_call.1} parent=39 // pred_check_branch
          %242 = sbr.rel (%p240) target = $region48
        $region47: #{tpu_custom_call.1} parent=39 // pred_region
          %244 = dma.done [#allocation8], 64
        $region48: #{tpu_custom_call.1} parent=39 // pred_fallthru
          _
        // Predicated region
        $region49: #{tpu_custom_call.1} parent=39 // pred_check
          %p245 = pneg %p128
        $region50: #{tpu_custom_call.1} parent=39 // pred_check_branch
          %247 = sbr.rel (%p245) target = $region52
        $region51: #{tpu_custom_call.1} parent=39 // pred_region
          %249 = dma.done [#allocation8], 128
        $region52: #{tpu_custom_call.1} parent=39 // pred_fallthru
          _
        %s250 = sand.u32 %s31, 1
        %s251 = scalar_lea.sflag [#allocation5], %s250
        %s252 = sand.u32 %s31, 1
        %s253 = smul.addr %s252, 8
        %s254 = scalar_lea.vmem [#allocation4], %s253
        %p255 = pneg %p44
        %p256 = pneg %p41
        %p257 = pneg %p65
        %p258 = pneg %p62
        %p259 = pneg %p86
        %p260 = pneg %p83
        %p261 = pneg %p107
        %p262 = pneg %p104
        %p263 = pneg %p128
        %p264 = pneg %p125
        %p265 = pneg %p154
        %p266 = pneg %p151
        %s267 = sand.u32 %s141, 1
        %s268 = scalar_lea.sflag [#allocation6], %s267
        %s269 = sand.u32 %s141, 1
        %s270 = smul.addr %s269, 8
        %s271 = scalar_lea.vmem [#allocation10], %s270
        %s272 = smul.u32 2, %s23
        %s273 = smul.u32 2, %s23
        %v274 = vld [vmem:[%s234] sm:$0xff]
        %276 = vst [vmem:[#allocation1] ss:$2 sm:$0xff] %v274
        %v277 = vld.sshfl [vmem:[#allocation1] sm:$0xff pattern:$0x75316420]
        %v278 = vld.sshfl [vmem:[#allocation1 + $0x8] sm:$0xff pattern:$0x75316420]
        %281 = vrot.lane.b32.xlu0 %v277, 17
        %v282 = vpop.permute.xlu0 %281
        %283 = vrot.lane.b32.xlu0 %v278, 17
        %v284 = vpop.permute.xlu0 %283
        %v285 = vlaneseq
        %v286 = vand.u32 %v285, 127
        %vm287 = vcmp.lt.s32.totalorder %v286, 17
        %v288 = vsel %vm287, %v282, %v284
        %v289 = vsel %vm287, %v284, %v282
        %s290 = scalar_lea.vmem [#allocation9], 1
        %v291 = vld [vmem:[%s290] ss:$4 sm:$0x3]
        %s292 = scalar_lea.vmem [#allocation9], 3
        %v293 = vld [vmem:[%s292] ss:$4 sm:$0x3]
        %v294 = vmul.f32 %v291, %v293
        %v296 = vperm.slane %v294, 0
        %v297 = vperm.slane %v294, 1
        %v300 = vmul.f32 %v289, %v296
        %v301 = vmul.f32 %v288, %v297
        %302 = vst [vmem:[#allocation2] sm:$0xf] %v300
        %303 = vst [vmem:[#allocation2 + $0x8] sm:$0xf] %v301
        %304 = vst [vmem:[#allocation1] ss:$2 sm:$0xff] %v274
        %v305 = vld.sshfl [vmem:[#allocation1] sm:$0xff pattern:$0x75316420]
        %v306 = vld.sshfl [vmem:[#allocation1 + $0x8] sm:$0xff pattern:$0x75316420]
        %309 = vrot.lane.b32.xlu0 %v305, 16
        %v310 = vpop.permute.xlu0 %309
        %311 = vrot.lane.b32.xlu0 %v306, 16
        %v312 = vpop.permute.xlu0 %311
        %vm313 = vcmp.lt.s32.totalorder %v286, 16
        %v314 = vsel %vm313, %v310, %v312
        %v315 = vsel %vm313, %v312, %v310
        %v316 = vld [vmem:[%s290] ss:$4 sm:$0x3]
        %v318 = vperm.slane %v316, 0
        %v319 = vperm.slane %v316, 1
        %v322 = vmul.f32 %v315, %v318
        %v323 = vmul.f32 %v314, %v319
        %v326 = vrot.slane %v322, 4
        %v327 = vrot.slane %v323, 4
        %330 = vst [vmem:[#allocation2] sm:$0xf0] %v326
        %331 = vst [vmem:[#allocation2 + $0x8] sm:$0xf0] %v327
        %332 = vst [vmem:[#allocation1] ss:$2 sm:$0xff] %v274
        %v333 = vld.sshfl [vmem:[#allocation1] sm:$0xff pattern:$0x75316420]
        %v334 = vld.sshfl [vmem:[#allocation1 + $0x8] sm:$0xff pattern:$0x75316420]
        %337 = vrot.lane.b32.xlu0 %v333, 15
        %v338 = vpop.permute.xlu0 %337
        %339 = vrot.lane.b32.xlu0 %v334, 15
        %v340 = vpop.permute.xlu0 %339
        %vm341 = vcmp.lt.s32.totalorder %v286, 15
        %v342 = vsel %vm341, %v338, %v340
        %v343 = vsel %vm341, %v340, %v338
        %v344 = vld [vmem:[%s290] ss:$4 sm:$0x3]
        %s345 = scalar_lea.vmem [#allocation9], 2
        %v346 = vld [vmem:[%s345] ss:$4 sm:$0x3]
        %v347 = vmul.f32 %v344, %v346
        %v349 = vperm.slane %v347, 0
        %v350 = vperm.slane %v347, 1
        %v353 = vmul.f32 %v343, %v349
        %v354 = vmul.f32 %v342, %v350
        %355 = vst [vmem:[#allocation2 + $0x10] sm:$0xf] %v353
        %356 = vst [vmem:[#allocation2 + $0x18] sm:$0xf] %v354
        %357 = vst [vmem:[#allocation1] ss:$2 sm:$0xff] %v274
        %v358 = vld.sshfl [vmem:[#allocation1] sm:$0xff pattern:$0x75316420]
        %v359 = vld.sshfl [vmem:[#allocation1 + $0x8] sm:$0xff pattern:$0x75316420]
        %362 = vrot.lane.b32.xlu0 %v358, 1
        %v363 = vpop.permute.xlu0 %362
        %364 = vrot.lane.b32.xlu0 %v359, 1
        %v365 = vpop.permute.xlu0 %364
        %vm366 = vcmp.lt.s32.totalorder %v286, 1
        %v367 = vsel %vm366, %v363, %v365
        %v368 = vsel %vm366, %v365, %v363
        %v369 = vld [vmem:[%s292] ss:$4 sm:$0x3]
        %v371 = vperm.slane %v369, 0
        %v372 = vperm.slane %v369, 1
        %v375 = vmul.f32 %v368, %v371
        %v376 = vmul.f32 %v367, %v372
        %v379 = vrot.slane %v375, 4
        %v380 = vrot.slane %v376, 4
        %383 = vst [vmem:[#allocation2 + $0x10] sm:$0xf0] %v379
        %384 = vst [vmem:[#allocation2 + $0x18] sm:$0xf0] %v380
        %385 = vst [vmem:[#allocation1] ss:$2 sm:$0xff] %v274
        %v386 = vld.sshfl [vmem:[#allocation1] sm:$0xff pattern:$0x75316420]
        %v387 = vld.sshfl [vmem:[#allocation1 + $0x8] sm:$0xff pattern:$0x75316420]
        %390 = vst [vmem:[#allocation2 + $0x20] sm:$0xf] %v386
        %391 = vst [vmem:[#allocation2 + $0x28] sm:$0xf] %v387
        %392 = vst [vmem:[#allocation1] ss:$2 sm:$0xff] %v274
        %v393 = vld.sshfl [vmem:[#allocation1] sm:$0xff pattern:$0x75316420]
        %v394 = vld.sshfl [vmem:[#allocation1 + $0x8] sm:$0xff pattern:$0x75316420]
        %397 = vrot.lane.b32.xlu0 %v393, 127
        %v398 = vpop.permute.xlu0 %397
        %399 = vrot.lane.b32.xlu0 %v394, 127
        %v400 = vpop.permute.xlu0 %399
        %vm401 = vcmp.lt.s32.totalorder %v286, 127
        %v402 = vsel %vm401, %v398, %v400
        %v403 = vsel %vm401, %v400, %v398
        %v404 = vld [vmem:[%s345] ss:$4 sm:$0x3]
        %v406 = vperm.slane %v404, 0
        %v407 = vperm.slane %v404, 1
        %v410 = vmul.f32 %v402, %v406
        %v411 = vmul.f32 %v403, %v407
        %v414 = vrot.slane %v410, 4
        %v415 = vrot.slane %v411, 4
        %418 = vst [vmem:[#allocation2 + $0x20] sm:$0xf0] %v414
        %419 = vst [vmem:[#allocation2 + $0x28] sm:$0xf0] %v415
        %420 = vst [vmem:[#allocation1] ss:$2 sm:$0xff] %v274
        %v421 = vld.sshfl [vmem:[#allocation1] sm:$0xff pattern:$0x75316420]
        %v422 = vld.sshfl [vmem:[#allocation1 + $0x8] sm:$0xff pattern:$0x75316420]
        %425 = vrot.lane.b32.xlu0 %v421, 113
        %v426 = vpop.permute.xlu0 %425
        %427 = vrot.lane.b32.xlu0 %v422, 113
        %v428 = vpop.permute.xlu0 %427
        %vm429 = vcmp.lt.s32.totalorder %v286, 113
        %v430 = vsel %vm429, %v426, %v428
        %v431 = vsel %vm429, %v428, %v426
        %v432 = vld [vmem:[#allocation9] ss:$4 sm:$0x3]
        %v433 = vld [vmem:[%s292] ss:$4 sm:$0x3]
        %v434 = vmul.f32 %v432, %v433
        %v436 = vperm.slane %v434, 0
        %v437 = vperm.slane %v434, 1
        %v440 = vmul.f32 %v430, %v436
        %v441 = vmul.f32 %v431, %v437
        %442 = vst [vmem:[#allocation2 + $0x30] sm:$0xf] %v440
        %443 = vst [vmem:[#allocation2 + $0x38] sm:$0xf] %v441
        %444 = vst [vmem:[#allocation1] ss:$2 sm:$0xff] %v274
        %v445 = vld.sshfl [vmem:[#allocation1] sm:$0xff pattern:$0x75316420]
        %v446 = vld.sshfl [vmem:[#allocation1 + $0x8] sm:$0xff pattern:$0x75316420]
        %449 = vrot.lane.b32.xlu0 %v445, 112
        %v450 = vpop.permute.xlu0 %449
        %451 = vrot.lane.b32.xlu0 %v446, 112
        %v452 = vpop.permute.xlu0 %451
        %vm453 = vcmp.lt.s32.totalorder %v286, 112
        %v454 = vsel %vm453, %v450, %v452
        %v455 = vsel %vm453, %v452, %v450
        %v456 = vld [vmem:[#allocation9] ss:$4 sm:$0x3]
        %v458 = vperm.slane %v456, 0
        %v459 = vperm.slane %v456, 1
        %v462 = vmul.f32 %v454, %v458
        %v463 = vmul.f32 %v455, %v459
        %v466 = vrot.slane %v462, 4
        %v467 = vrot.slane %v463, 4
        %470 = vst [vmem:[#allocation2 + $0x30] sm:$0xf0] %v466
        %471 = vst [vmem:[#allocation2 + $0x38] sm:$0xf0] %v467
        %472 = vst [vmem:[#allocation1] ss:$2 sm:$0xff] %v274
        %v473 = vld.sshfl [vmem:[#allocation1] sm:$0xff pattern:$0x75316420]
        %v474 = vld.sshfl [vmem:[#allocation1 + $0x8] sm:$0xff pattern:$0x75316420]
        %477 = vrot.lane.b32.xlu0 %v473, 111
        %v478 = vpop.permute.xlu0 %477
        %479 = vrot.lane.b32.xlu0 %v474, 111
        %v480 = vpop.permute.xlu0 %479
        %vm481 = vcmp.lt.s32.totalorder %v286, 111
        %v482 = vsel %vm481, %v478, %v480
        %v483 = vsel %vm481, %v480, %v478
        %v484 = vld [vmem:[#allocation9] ss:$4 sm:$0x3]
        %v485 = vld [vmem:[%s345] ss:$4 sm:$0x3]
        %v486 = vmul.f32 %v484, %v485
        %v488 = vperm.slane %v486, 0
        %v489 = vperm.slane %v486, 1
        %v492 = vmul.f32 %v482, %v488
        %v493 = vmul.f32 %v483, %v489
        %494 = vst [vmem:[#allocation2 + $0x40] sm:$0xf] %v492
        %495 = vst [vmem:[#allocation2 + $0x48] sm:$0xf] %v493
        %v496 = vld [vmem:[%s1] sm:$0xff]
        %v497 = vld [vmem:[#allocation2] sm:$0xff]
        %v498 = vld [vmem:[#allocation2 + $0x8] sm:$0xff]
        %v499 = vld [vmem:[#allocation2 + $0x10] sm:$0xff]
        %v500 = vld [vmem:[#allocation2 + $0x18] sm:$0xff]
        %v501 = vld [vmem:[#allocation2 + $0x20] sm:$0xff]
        %v502 = vld [vmem:[#allocation2 + $0x28] sm:$0xff]
        %v503 = vld [vmem:[#allocation2 + $0x30] sm:$0xff]
        %v504 = vld [vmem:[#allocation2 + $0x38] sm:$0xff]
        %v505 = vld [vmem:[#allocation2 + $0x40] sm:$0xf]
        %v506 = vld [vmem:[#allocation2 + $0x48] sm:$0xf]
        %v507 = vld [vmem:[%s3] sm:$0xff]
        %509 = vset.pattern.permute.xlu0 0
        %510 = vperm.xlu0 %509, %v507
        %v511 = vpop.permute.xlu0 %510
        %vm513 = vcmask 293888
        %v515 = vsel %vm513, %v496, 0
        %vm517 = vcmask 1043456
        %v519 = vsel %vm517, %v505, 0
        %v522 = vsel %vm517, %v506, 0
        %524 = vmatpush.msra.mxu0 0.0
        %525 = vmatpush.msra.mxu0 0.0
        %526 = vmatpush.msra.mxu0 0.0
        %527 = vmatpush.msra.mxu0 0.0
        %528 = vmatpush.msra.mxu0 0.0
        %529 = vmatpush.msra.mxu0 0.0
        %530 = vmatpush.msra.mxu0 0.0
        %531 = vmatpush.msra.mxu0 0.0
        %532 = vmatpush.msra.mxu0 0.0
        %533 = vmatpush.msra.mxu0 0.0
        %534 = vmatpush.msra.mxu0 0.0
        %535 = vmatpush.msra.mxu0 %v519
        %536 = vmatpush.msra.mxu0 %v503
        %537 = vmatpush.msra.mxu0 %v501
        %538 = vmatpush.msra.mxu0 %v499
        %539 = vmatpush.msra.mxu0 %v497
        %540 = vmatmul.f32.gmra.mxu0 %v515
        %v541 = vpop.f32.mrf.mxu0
        %v542 = vadd.f32 %v511, %v541
        %543 = vdwg.mxu0
        %544 = vmatpush.msra.mxu0 0.0
        %545 = vmatpush.msra.mxu0 0.0
        %546 = vmatpush.msra.mxu0 0.0
        %547 = vmatpush.msra.mxu0 0.0
        %548 = vmatpush.msra.mxu0 0.0
        %549 = vmatpush.msra.mxu0 0.0
        %550 = vmatpush.msra.mxu0 0.0
        %551 = vmatpush.msra.mxu0 0.0
        %552 = vmatpush.msra.mxu0 0.0
        %553 = vmatpush.msra.mxu0 0.0
        %554 = vmatpush.msra.mxu0 0.0
        %555 = vmatpush.msra.mxu0 %v522
        %556 = vmatpush.msra.mxu0 %v504
        %557 = vmatpush.msra.mxu0 %v502
        %558 = vmatpush.msra.mxu0 %v500
        %559 = vmatpush.msra.mxu0 %v498
        %560 = vmatmul.f32.gmra.mxu0 %v515
        %v561 = vpop.f32.mrf.mxu0
        %v562 = vadd.f32 %v511, %v561
        %563 = vdwg.mxu0
        %v564 = vmax.f32 %v542, 0.0
        %v565 = vmax.f32 %v562, 0.0
        %566 = vrot.lane.b32.xlu0 %v564, 17
        %v567 = vpop.permute.xlu0 %566
        %568 = vrot.lane.b32.xlu0 %v565, 17
        %v569 = vpop.permute.xlu0 %568
        %v570 = vsel %vm287, %v567, %v569
        %v571 = vsel %vm287, %v569, %v567
        %v572 = vld [vmem:[%s290] ss:$4 sm:$0x3]
        %v573 = vld [vmem:[%s292] ss:$4 sm:$0x3]
        %v574 = vmul.f32 %v572, %v573
        %v576 = vperm.slane %v574, 0
        %v577 = vperm.slane %v574, 1
        %v580 = vmul.f32 %v571, %v576
        %v581 = vmul.f32 %v570, %v577
        %582 = vst [vmem:[#allocation3] sm:$0xff] %v580
        %583 = vst [vmem:[#allocation3 + $0x8] sm:$0xff] %v581
        %584 = vrot.lane.b32.xlu0 %v564, 16
        %v585 = vpop.permute.xlu0 %584
        %586 = vrot.lane.b32.xlu0 %v565, 16
        %v587 = vpop.permute.xlu0 %586
        %v588 = vsel %vm313, %v585, %v587
        %v589 = vsel %vm313, %v587, %v585
        %v590 = vld [vmem:[%s290] ss:$4 sm:$0x3]
        %v592 = vperm.slane %v590, 0
        %v593 = vperm.slane %v590, 1
        %v596 = vmul.f32 %v589, %v592
        %v597 = vmul.f32 %v588, %v593
        %598 = vst [vmem:[#allocation3 + $0x10] sm:$0xff] %v596
        %599 = vst [vmem:[#allocation3 + $0x18] sm:$0xff] %v597
        %600 = vrot.lane.b32.xlu0 %v564, 15
        %v601 = vpop.permute.xlu0 %600
        %602 = vrot.lane.b32.xlu0 %v565, 15
        %v603 = vpop.permute.xlu0 %602
        %v604 = vsel %vm341, %v601, %v603
        %v605 = vsel %vm341, %v603, %v601
        %v606 = vld [vmem:[%s290] ss:$4 sm:$0x3]
        %v607 = vld [vmem:[%s345] ss:$4 sm:$0x3]
        %v608 = vmul.f32 %v606, %v607
        %v610 = vperm.slane %v608, 0
        %v611 = vperm.slane %v608, 1
        %v614 = vmul.f32 %v605, %v610
        %v615 = vmul.f32 %v604, %v611
        %616 = vst [vmem:[#allocation3 + $0x20] sm:$0xff] %v614
        %617 = vst [vmem:[#allocation3 + $0x28] sm:$0xff] %v615
        %618 = vrot.lane.b32.xlu0 %v564, 1
        %v619 = vpop.permute.xlu0 %618
        %620 = vrot.lane.b32.xlu0 %v565, 1
        %v621 = vpop.permute.xlu0 %620
        %v622 = vsel %vm366, %v619, %v621
        %v623 = vsel %vm366, %v621, %v619
        %v624 = vld [vmem:[%s292] ss:$4 sm:$0x3]
        %v626 = vperm.slane %v624, 0
        %v627 = vperm.slane %v624, 1
        %v630 = vmul.f32 %v623, %v626
        %v631 = vmul.f32 %v622, %v627
        %632 = vst [vmem:[#allocation3 + $0x30] sm:$0xff] %v630
        %633 = vst [vmem:[#allocation3 + $0x38] sm:$0xff] %v631
        %634 = vst [vmem:[#allocation3 + $0x40] sm:$0xff] %v564
        %635 = vst [vmem:[#allocation3 + $0x48] sm:$0xff] %v565
        %636 = vrot.lane.b32.xlu0 %v564, 127
        %v637 = vpop.permute.xlu0 %636
        %638 = vrot.lane.b32.xlu0 %v565, 127
        %v639 = vpop.permute.xlu0 %638
        %v640 = vsel %vm401, %v637, %v639
        %v641 = vsel %vm401, %v639, %v637
        %v642 = vld [vmem:[%s345] ss:$4 sm:$0x3]
        %v644 = vperm.slane %v642, 0
        %v645 = vperm.slane %v642, 1
        %v648 = vmul.f32 %v640, %v644
        %v649 = vmul.f32 %v641, %v645
        %650 = vst [vmem:[#allocation3 + $0x50] sm:$0xff] %v648
        %651 = vst [vmem:[#allocation3 + $0x58] sm:$0xff] %v649
        %652 = vrot.lane.b32.xlu0 %v564, 113
        %v653 = vpop.permute.xlu0 %652
        %654 = vrot.lane.b32.xlu0 %v565, 113
        %v655 = vpop.permute.xlu0 %654
        %v656 = vsel %vm429, %v653, %v655
        %v657 = vsel %vm429, %v655, %v653
        %v658 = vld [vmem:[#allocation9] ss:$4 sm:$0x3]
        %v659 = vld [vmem:[%s292] ss:$4 sm:$0x3]
        %v660 = vmul.f32 %v658, %v659
        %v662 = vperm.slane %v660, 0
        %v663 = vperm.slane %v660, 1
        %v666 = vmul.f32 %v656, %v662
        %v667 = vmul.f32 %v657, %v663
        %668 = vst [vmem:[#allocation3 + $0x60] sm:$0xff] %v666
        %669 = vst [vmem:[#allocation3 + $0x68] sm:$0xff] %v667
        %670 = vrot.lane.b32.xlu0 %v564, 112
        %v671 = vpop.permute.xlu0 %670
        %672 = vrot.lane.b32.xlu0 %v565, 112
        %v673 = vpop.permute.xlu0 %672
        %v674 = vsel %vm453, %v671, %v673
        %v675 = vsel %vm453, %v673, %v671
        %v676 = vld [vmem:[#allocation9] ss:$4 sm:$0x3]
        %v678 = vperm.slane %v676, 0
        %v679 = vperm.slane %v676, 1
        %v682 = vmul.f32 %v674, %v678
        %v683 = vmul.f32 %v675, %v679
        %684 = vst [vmem:[#allocation3 + $0x70] sm:$0xff] %v682
        %685 = vst [vmem:[#allocation3 + $0x78] sm:$0xff] %v683
        %686 = vrot.lane.b32.xlu0 %v564, 111
        %v687 = vpop.permute.xlu0 %686
        %688 = vrot.lane.b32.xlu0 %v565, 111
        %v689 = vpop.permute.xlu0 %688
        %v690 = vsel %vm481, %v687, %v689
        %v691 = vsel %vm481, %v689, %v687
        %v692 = vld [vmem:[#allocation9] ss:$4 sm:$0x3]
        %v693 = vld [vmem:[%s345] ss:$4 sm:$0x3]
        %v694 = vmul.f32 %v692, %v693
        %v696 = vperm.slane %v694, 0
        %v697 = vperm.slane %v694, 1
        %v700 = vmul.f32 %v690, %v696
        %v701 = vmul.f32 %v691, %v697
        %702 = vst [vmem:[#allocation3 + $0x80] sm:$0xff] %v700
        %703 = vst [vmem:[#allocation3 + $0x88] sm:$0xff] %v701
        %v704 = vld [vmem:[#allocation7] sm:$0xf]
        %v705 = vld [vmem:[#allocation3] sm:$0xff]
        %v706 = vld [vmem:[#allocation3 + $0x8] sm:$0xff]
        %v707 = vld [vmem:[#allocation3 + $0x10] sm:$0xff]
        %v708 = vld [vmem:[#allocation3 + $0x18] sm:$0xff]
        %v709 = vld [vmem:[#allocation3 + $0x20] sm:$0xff]
        %v710 = vld [vmem:[#allocation3 + $0x28] sm:$0xff]
        %v711 = vld [vmem:[#allocation3 + $0x30] sm:$0xff]
        %v712 = vld [vmem:[#allocation3 + $0x38] sm:$0xff]
        %v713 = vld [vmem:[#allocation3 + $0x40] sm:$0xff]
        %v714 = vld [vmem:[#allocation3 + $0x48] sm:$0xff]
        %v715 = vld [vmem:[#allocation3 + $0x50] sm:$0xff]
        %v716 = vld [vmem:[#allocation3 + $0x58] sm:$0xff]
        %v717 = vld [vmem:[#allocation3 + $0x60] sm:$0xff]
        %v718 = vld [vmem:[#allocation3 + $0x68] sm:$0xff]
        %v719 = vld [vmem:[#allocation3 + $0x70] sm:$0xff]
        %v720 = vld [vmem:[#allocation3 + $0x78] sm:$0xff]
        %v721 = vld [vmem:[#allocation3 + $0x80] sm:$0xff]
        %v722 = vld [vmem:[#allocation3 + $0x88] sm:$0xff]
        %vm723 = vcmask 588800
        %v725 = vsel %vm723, %v704, 0
        %727 = vmatpush.msra.mxu0 0.0
        %728 = vmatpush.msra.mxu0 0.0
        %729 = vmatpush.msra.mxu0 0.0
        %730 = vmatpush.msra.mxu0 0.0
        %731 = vmatpush.msra.mxu0 0.0
        %732 = vmatpush.msra.mxu0 0.0
        %733 = vmatpush.msra.mxu0 0.0
        %734 = vmatpush.msra.mxu0 %v721
        %735 = vmatpush.msra.mxu0 %v719
        %736 = vmatpush.msra.mxu0 %v717
        %737 = vmatpush.msra.mxu0 %v715
        %738 = vmatpush.msra.mxu0 %v713
        %739 = vmatpush.msra.mxu0 %v711
        %740 = vmatpush.msra.mxu0 %v709
        %741 = vmatpush.msra.mxu0 %v707
        %742 = vmatpush.msra.mxu0 %v705
        %743 = vmatmul.f32.gmra.mxu0 %v725
        %v744 = vpop.f32.mrf.mxu0
        %v745 = vadd.f32 0.0, %v744
        %746 = vdwg.mxu0
        %747 = vmatpush.msra.mxu0 0.0
        %748 = vmatpush.msra.mxu0 0.0
        %749 = vmatpush.msra.mxu0 0.0
        %750 = vmatpush.msra.mxu0 0.0
        %751 = vmatpush.msra.mxu0 0.0
        %752 = vmatpush.msra.mxu0 0.0
        %753 = vmatpush.msra.mxu0 0.0
        %754 = vmatpush.msra.mxu0 %v722
        %755 = vmatpush.msra.mxu0 %v720
        %756 = vmatpush.msra.mxu0 %v718
        %757 = vmatpush.msra.mxu0 %v716
        %758 = vmatpush.msra.mxu0 %v714
        %759 = vmatpush.msra.mxu0 %v712
        %760 = vmatpush.msra.mxu0 %v710
        %761 = vmatpush.msra.mxu0 %v708
        %762 = vmatpush.msra.mxu0 %v706
        %763 = vmatmul.f32.gmra.mxu0 %v725
        %v764 = vpop.f32.mrf.mxu0
        %v765 = vadd.f32 0.0, %v764
        %766 = vdwg.mxu0
        %v769 = vrot.slane %v765, 4
        %v770 = vsel %vm517, %v745, %v769
        %v772 = vadd.f32 %v274, %v770
        %773 = vst [vmem:[%s271] sm:$0xff] %v772
        %s774 = sand.u32 %s141, 1
        %s775 = scalar_lea.sflag [#allocation6], %s774
        %s776 = sand.u32 %s141, 1
        %s777 = smul.addr %s776, 8
        %s778 = scalar_lea.vmem [#allocation10], %s777
        // Predicated region
        $region53: #{tpu_custom_call.1} parent=39 // pred_check
          %p779 = pneg %p151
        $region54: #{tpu_custom_call.1} parent=39 // pred_check_branch
          %781 = sbr.rel (%p779) target = $region56
        $region55: #{tpu_custom_call.1} parent=39 // pred_region
          %s782 = smul.u32 2, %s23
          %784 = vsyncadd %s775, 0
          %s785 = smul.addr %s782, 4
          %s786 = scalar_lea.hbm %s5, %s785
          %s788 = sshll.u32 %s778, 4
          %s789 = int_to_ptr.vmem [resolvable:$true] %s788
          %s790 = sshll.u32 %s786, 4
          %s791 = int_to_ptr.hbm [resolvable:$true] %s790
          %793 = dma.vmem_to_hbm [thread:$0]  %s789, 128, %s791, %s775
        $region56: #{tpu_custom_call.1} parent=39 // pred_fallthru
          _
      $region40: #{tpu_custom_call.1} parent=5 // pred_fallthru
        _
      %p794 = scmp.le.s32.totalorder 2, %s18
      // Predicated region
      $region57: #{tpu_custom_call.1} parent=5 // pred_check
        %p795 = pneg %p794
      $region58: #{tpu_custom_call.1} parent=5 // pred_check_branch
        %797 = sbr.rel (%p795) target = $region60
      $region59: #{tpu_custom_call.1} parent=5 // pred_region
        %s798 = ssub.s32 %s18, 2
        // Predicated region
        $region61: #{tpu_custom_call.1} parent=59 // pred_check
          %p799 = pneg %p157
        $region62: #{tpu_custom_call.1} parent=59 // pred_check_branch
          %801 = sbr.rel (%p799) target = $region64
        $region63: #{tpu_custom_call.1} parent=59 // pred_region
          %s802 = sand.u32 %s142, 1
          %s803 = scalar_lea.sflag [#allocation6], %s802
          %s804 = sand.u32 %s142, 1
          %s805 = smul.addr %s804, 8
          %s806 = scalar_lea.vmem [#allocation10], %s805
          %808 = dma.done %s803, 128
        $region64: #{tpu_custom_call.1} parent=59 // pred_fallthru
          _
      $region60: #{tpu_custom_call.1} parent=5 // pred_fallthru
        _
    $region6: #{tpu_custom_call.1} parent=1 // loop_footer
      %s22 = sadd.s32 1, %s18
    $region7: #{tpu_custom_call.1} parent=1 // loop_footer_branch
      %17 = sbr.rel target = $region3
    $region8: #{tpu_custom_call.1} parent=1 // loop_exit
      _
    %809 = vsyncpa [#allocation5], 1
    %s810 = scalar_lea.sflag [#allocation5], 1
    %811 = vsyncpa %s810, 1
    %812 = vsyncpa [#allocation8], 1
    %813 = vsyncpa [#allocation6], 1
    %s814 = scalar_lea.sflag [#allocation6], 1
    %815 = vsyncpa %s814, 1

</llo_original>
